<compile_context>
chip_gen: v7x
topology: tpu7x:2x2x1
jax: 0.10.0
libtpu: 0.0.40
codegen_flags: <defaults>
</compile_context>

<pallas_src>
import jax
import jax.numpy as jnp
from jax.experimental import pallas as pl
from jax.experimental.pallas import tpu as pltpu

_LANE = 128            # TPU lane width: keep the last dim a multiple of this.
_MAX_TILE_ROWS = 512   # measured copy roofline ~85%+ at 512-1024 row tiles.
_MAX_TILE_BYTES = 4 << 20  # keep 4x (in+out, double-buffered) under ~17 MiB.


def _identity_kernel(x_ref, o_ref):
    # DummyLayerNorm.forward: return x  (pure passthrough)
    o_ref[...] = x_ref[...]


def _sublane_multiple(dtype) -> int:
    """Minimum row multiple for the (8,128) tiling rule, by dtype width."""
    itemsize = jnp.dtype(dtype).itemsize
    return {4: 8, 2: 16, 1: 32}.get(itemsize, 8)


def dummy_layer_norm(x, normalized_shape=None, eps=1e-5):
    """Identity forward matching DummyLayerNorm.forward (params unused)."""
    del normalized_shape, eps  # the module ignores them

    orig_shape = x.shape
    orig_dtype = x.dtype
    hidden = orig_shape[-1]
    itemsize = jnp.dtype(orig_dtype).itemsize
    sub = _sublane_multiple(orig_dtype)

    total_elems = 1
    for d in orig_shape:
        total_elems *= d

    # --- Present a lane-dense 2D slab -----------------------------------
    if hidden % _LANE == 0:
        # Real GPT-2 case (H=768 etc.): keep the natural (rows, H) layout.
        x2d = x.reshape(-1, hidden)
        flattened = False
    else:
        # Small / odd H: flatten and reshape to 128-lane rows so stores are
        # full-lane (no masked vst.msk on a <128 last dim).
        flat = x.reshape(-1)
        padded_elems = pl.cdiv(total_elems, _LANE) * _LANE
        if padded_elems != total_elems:
            flat = jnp.pad(flat, (0, padded_elems - total_elems))
        x2d = flat.reshape(-1, _LANE)
        flattened = True

    rows, width = x2d.shape
    row_bytes = width * itemsize

    # --- Fixed row tile, capped by both row count and VMEM budget --------
    tile_rows = min(_MAX_TILE_ROWS, pl.cdiv(rows, sub) * sub)
    budget_rows = max(sub, (_MAX_TILE_BYTES // row_bytes) // sub * sub)
    tile_rows = max(sub, min(tile_rows, budget_rows))

    # Pad rows so every grid step is a full block (no silent tail drop,
    # no partial boundary blocks).
    grid_rows = pl.cdiv(rows, tile_rows)
    padded_rows = grid_rows * tile_rows
    if padded_rows != rows:
        x2d = jnp.pad(x2d, ((0, padded_rows - rows), (0, 0)))

    # Double-buffered input + output tiles, plus headroom.
    vmem_bytes = 4 * tile_rows * row_bytes + (1 << 20)

    out = pl.pallas_call(
        _identity_kernel,
        out_shape=jax.ShapeDtypeStruct((padded_rows, width), orig_dtype),
        grid=(grid_rows,),
        in_specs=[pl.BlockSpec((tile_rows, width), lambda i: (i, 0))],
        out_specs=pl.BlockSpec((tile_rows, width), lambda i: (i, 0)),
        compiler_params=pltpu.CompilerParams(
            dimension_semantics=("parallel",),
            vmem_limit_bytes=vmem_bytes,
        ),
    )(x2d)

    # --- Undo padding / reshaping ----------------------------------------
    out = out[:rows]
    if flattened:
        return out.reshape(-1)[:total_elems].reshape(orig_shape)
    return out.reshape(orig_shape)


if __name__ == "__main__":
    key = jax.random.PRNGKey(0)
    # batch=2, seq=8, hidden=32 — typical small GPT-2 activation shape.
    x = jax.random.normal(key, (2, 8, 32), dtype=jnp.float32)

    y = dummy_layer_norm(x, normalized_shape=32, eps=1e-5)
    y = jax.block_until_ready(y)

    assert y.shape == x.shape and y.dtype == x.dtype
    assert bool(jnp.array_equal(y, x))

    # Also exercise a "real" GPT-2-sized activation to confirm the fixed
    # tiling path (multi-step grid, lane-dense H=768) runs and is exact.
    x_big = jax.random.normal(jax.random.PRNGKey(1), (8, 1024, 768),
                              dtype=jnp.float32)
    y_big = jax.block_until_ready(dummy_layer_norm(x_big))
    assert bool(jnp.array_equal(y_big, x_big))

    print("KERNEL_OK")
</pallas_src>

<mosaic_0001>
module attributes {stable_mosaic.version = 11 : i64} {
  func.func @_identity_kernel(%arg0: i32, %arg1: memref<8x128xf32, #tpu.memory_space<vmem>>, %arg2: memref<8x128xf32, #tpu.memory_space<vmem>>) attributes {dimension_semantics = [#tpu.dimension_semantics<parallel>], iteration_bounds = array<i64: 1>, scalar_prefetch = 0 : i64, scratch_operands = 0 : i64, tpu.core_type = #tpu.core_type<tc>, window_params = [{transform_indices = @transform_0, window_bounds = array<i64: 8, 128>}, {transform_indices = @transform_1, window_bounds = array<i64: 8, 128>}]} {
    %c0 = arith.constant 0 : index
    %c0_0 = arith.constant 0 : index
    %0 = vector.load %arg1[%c0, %c0_0] : memref<8x128xf32, #tpu.memory_space<vmem>>, vector<8x128xf32>
    %c0_1 = arith.constant 0 : index
    %c0_2 = arith.constant 0 : index
    %1 = vector.load %arg2[%c0_1, %c0_2] : memref<8x128xf32, #tpu.memory_space<vmem>>, vector<8x128xf32>
    tpu.vector_store %arg2[%c0_1, %c0_2], %0 {strides = array<i32>} : memref<8x128xf32, #tpu.memory_space<vmem>>, vector<8x128xf32>,
    return
  }
  func.func @transform_0(%arg0: i32) -> (i32, i32) {
    %c0_i32 = arith.constant 0 : i32
    %c0_i32_0 = arith.constant 0 : i32
    return %arg0, %c0_i32 : i32, i32
  }
  func.func @transform_1(%arg0: i32) -> (i32, i32) {
    %c0_i32 = arith.constant 0 : i32
    %c0_i32_0 = arith.constant 0 : i32
    return %arg0, %c0_i32 : i32, i32
  }
}

</mosaic_0001>

<llo_original>
// kernel: tpu_custom_call.1
$region0: #{tpu_custom_call.1}
  #allocation0 [shape = 'u32[]', space=smem, size = 0x4, offset = 0x4, fixed_abs, tag = 'smem constant byte address 0x4 - core index']
  #allocation1 [shape = 'u32[144,128]{1,0:T(1,128)}', space=vmem, size = 0x12000, scoped, tag = 'internal scratch']
  %s0 = inlined_call_operand.hbm [shape: f32[8,128], index: 0, kind: input, shape index: {}]
  %s1 = inlined_call_operand.hbm [shape: f32[8,128], index: 1, kind: output, shape index: {}]
  %s2 = sld [smem:[#allocation0]]
  $region18: #{tpu_custom_call.1} parent=0
    _
  %s4 = ssub.s32 1, %s2
  %s5 = scalar_select 0, %s4, %s2
  $region1: #{tpu_custom_call.1} parent=0
    #allocation2 [shape = 'u8[4096]{0}', space=vmem, size = 0x1000, scoped, tag = 'input window, operand 0, single buffered']
    #allocation3 [shape = 's32[1]{0}', space=sflag, size = 0x4, scoped, tag = 'scoped memory for tpu_custom_call.1']
    #allocation4 [shape = 's32[1]{0}', space=sflag, size = 0x4, scoped, tag = 'scoped memory for tpu_custom_call.1']
    #allocation5 [shape = 'u8[4096]{0}', space=vmem, size = 0x1000, scoped, tag = 'output window, operand 0, single buffered']
    %6 = vsyncpa [#allocation3], 0
    %7 = vsyncpa [#allocation4], 0
    // Predicated region
    $region2: #{tpu_custom_call.1} parent=1 // pred_check
      _
    $region3: #{tpu_custom_call.1} parent=1 // pred_check_branch
      %9 = sbr.rel (0) target = $region5
    $region4: #{tpu_custom_call.1} parent=1 // pred_region
      %s11 = ssub.s32 128, 128
      %12 = vsyncadd [#allocation3], %s11
      %s14 = sshll.u32 [#allocation2], 4
      %s15 = int_to_ptr.vmem [resolvable:$true] %s14
      %17 = dma.hbm_to_vmem [thread:$0]  %s0, 128, %s15, [#allocation3]
    $region5: #{tpu_custom_call.1} parent=1 // pred_fallthru
      _
    // Predicated region
    $region6: #{tpu_custom_call.1} parent=1 // pred_check
      _
    $region7: #{tpu_custom_call.1} parent=1 // pred_check_branch
      %19 = sbr.rel (0) target = $region9
    $region8: #{tpu_custom_call.1} parent=1 // pred_region
      %20 = dma.done [#allocation3], 128
    $region9: #{tpu_custom_call.1} parent=1 // pred_fallthru
      _
    %v21 = vld [vmem:[#allocation2] sm:$0xff]
    %22 = vst [vmem:[#allocation5] sm:$0xff] %v21
    // Predicated region
    $region10: #{tpu_custom_call.1} parent=1 // pred_check
      _
    $region11: #{tpu_custom_call.1} parent=1 // pred_check_branch
      %24 = sbr.rel (0) target = $region13
    $region12: #{tpu_custom_call.1} parent=1 // pred_region
      %s26 = ssub.s32 128, 128
      %27 = vsyncadd [#allocation4], %s26
      %s29 = sshll.u32 [#allocation5], 4
      %s30 = int_to_ptr.vmem [resolvable:$true] %s29
      %32 = dma.vmem_to_hbm [thread:$0]  %s30, 128, %s1, [#allocation4]
    $region13: #{tpu_custom_call.1} parent=1 // pred_fallthru
      _
    // Predicated region
    $region14: #{tpu_custom_call.1} parent=1 // pred_check
      _
    $region15: #{tpu_custom_call.1} parent=1 // pred_check_branch
      %34 = sbr.rel (0) target = $region17
    $region16: #{tpu_custom_call.1} parent=1 // pred_region
      %35 = dma.done [#allocation4], 128
    $region17: #{tpu_custom_call.1} parent=1 // pred_fallthru
      _
    %36 = vsyncpa [#allocation3], 1
    %37 = vsyncpa [#allocation4], 1

</llo_original>
